<compile_context>
chip_gen: v7x
topology: tpu7x:2x2x1
jax: 0.10.0
libtpu: 0.0.40
codegen_flags: <defaults>
</compile_context>

<pallas_src>
import jax
import jax.numpy as jnp
from jax import lax
from jax.experimental import pallas as pl
from jax.experimental.pallas import tpu as pltpu

BN_EPS = 1e-5


def dvn_kernel(x_ref, w1_ref, b1_ref, w2_ref, b2_ref, out_ref):
    # x_ref:  [bt, F]   bf16 flattened-feature tile (streamed over the grid)
    # w1_ref: [F, 256]  bf16, BatchNorm scale folded in, resident
    # b1_ref: [1, 256]  f32,  BatchNorm shift folded in, resident
    # w2_ref: [1, 256]  f32,  value-head weight row (lane reduction, not matmul)
    # b2_ref: [1, 1]    f32
    # out_ref:[bt, 1]   f32
    h = jnp.dot(x_ref[...], w1_ref[...], preferred_element_type=jnp.float32)
    h = jnp.maximum(h + b1_ref[...], 0.0)                       # [bt, 256]
    v = jnp.sum(h * w2_ref[...], axis=-1, keepdims=True) + b2_ref[...]
    out_ref[...] = v.astype(out_ref.dtype)                      # [bt, 1]


def _cdiv(a, b):
    return (a + b - 1) // b


def _round_up(a, m):
    return ((a + m - 1) // m) * m


def dvn_forward(obs, params, *, block_rows=512):
    """obs: [B, C, H, W] float32 (NCHW). Returns value estimates [B, 1]."""
    B = obs.shape[0]
    feature = obs.reshape(B, -1).astype(jnp.float32)   # FlattenExtractor (glue)
    F = feature.shape[1]
    H1 = params["w1"].shape[1]

    # --- BatchNorm1d training-mode stats (full batch, biased, centered var),
    #     folded into w1/b1 so the kernel streams x straight into the MXU. ---
    mean = jnp.mean(feature, axis=0, keepdims=True)                       # [1, F]
    var = jnp.mean(jnp.square(feature - mean), axis=0, keepdims=True)     # [1, F]
    inv_std = lax.rsqrt(var + BN_EPS)
    scale = params["gamma"] * inv_std                                     # [1, F]
    shift = params["beta"] - mean * scale                                 # [1, F]
    w1_f32 = params["w1"].astype(jnp.float32)                             # [F, H1]
    w1_folded = (w1_f32 * scale.reshape(F, 1)).astype(jnp.bfloat16)       # bf16
    b1_folded = params["b1"] + shift @ w1_f32                             # [1, H1]

    # Activations streamed in bf16: halves the dominant HBM traffic.
    x_bf16 = feature.astype(jnp.bfloat16)

    # --- batch tiling: multiple of 16 sublanes (bf16 packing); no padding —
    #     ragged last tile is masked by Pallas. Keep >= 2 grid tiles when the
    #     batch allows it so the "parallel" axis can shard across v7x's 2 TCs. ---
    if B <= 16:
        bt = B                                   # single full-extent block
    else:
        bt = min(int(block_rows), _round_up(B, 16))
        if _cdiv(B, bt) < 2:
            bt = _cdiv(B, 2)
        bt = max(16, _round_up(bt, 16))
    grid = (_cdiv(B, bt),)

    resident = lambda shape: pl.BlockSpec(shape, lambda i: (0, 0))

    out = pl.pallas_call(
        dvn_kernel,
        out_shape=jax.ShapeDtypeStruct((B, 1), jnp.float32),
        grid_spec=pltpu.PrefetchScalarGridSpec(
            num_scalar_prefetch=0,
            grid=grid,
            in_specs=[
                pl.BlockSpec((bt, F), lambda i: (i, 0)),   # x  (bf16, streamed)
                resident((F, H1)),                         # w1 (bf16, BN-folded)
                resident((1, H1)),                         # b1 (BN-folded)
                resident((1, H1)),                         # w2 row
                resident((1, 1)),                          # b2
            ],
            out_specs=pl.BlockSpec((bt, 1), lambda i: (i, 0)),
        ),
        compiler_params=pltpu.CompilerParams(
            dimension_semantics=("parallel",)),
        cost_estimate=pl.CostEstimate(
            flops=2 * B * F * H1 + 4 * B * H1,
            transcendentals=0,
            bytes_accessed=(B * F * 2          # x bf16
                            + F * H1 * 2       # w1 bf16
                            + H1 * 4 * 2 + 4   # b1, w2, b2
                            + B * 4)),         # out
    )(x_bf16, w1_folded, b1_folded, params["w2"], params["b2"])
    return out


def init_params(key, features_dim=512, hidden_dim=256):
    """Deterministic synthetic parameters matching the module's shapes."""
    k1, k2, k3, k4, k5, k6 = jax.random.split(key, 6)
    # BatchNorm1d affine (perturbed slightly so the affine path is exercised).
    gamma = jnp.ones((1, features_dim), jnp.float32) \
        + 0.01 * jax.random.normal(k1, (1, features_dim), jnp.float32)
    beta = 0.01 * jax.random.normal(k2, (1, features_dim), jnp.float32)
    # nn.Linear(features_dim, 256): stored transposed [in, out], kept in f32 so
    # the BatchNorm fold happens in f32 before the bf16 cast.
    w1 = jax.random.normal(k3, (features_dim, hidden_dim), jnp.float32) \
        * (1.0 / jnp.sqrt(features_dim))
    b1 = jax.random.normal(k4, (1, hidden_dim), jnp.float32) \
        * (1.0 / jnp.sqrt(features_dim))
    # nn.Linear(256, 1): stored as a [1, 256] row (lane reduction in-kernel).
    w2 = jax.random.normal(k5, (1, hidden_dim), jnp.float32) \
        * (1.0 / jnp.sqrt(hidden_dim))
    b2 = jax.random.normal(k6, (1, 1), jnp.float32) * (1.0 / jnp.sqrt(hidden_dim))
    return dict(gamma=gamma, beta=beta, w1=w1, b1=b1, w2=w2, b2=b2)


def reference_forward(obs, params):
    """Pure-JAX f32 reference (un-folded BN, f32 matmuls) for a sanity check."""
    x = obs.reshape(obs.shape[0], -1).astype(jnp.float32)
    mean = jnp.mean(x, axis=0, keepdims=True)
    var = jnp.mean((x - mean) ** 2, axis=0, keepdims=True)
    y = (x - mean) / jnp.sqrt(var + BN_EPS) * params["gamma"] + params["beta"]
    h = jnp.maximum(y @ params["w1"] + params["b1"], 0.0)
    return jnp.sum(h * params["w2"], axis=-1, keepdims=True) + params["b2"]


if __name__ == "__main__":
    key = jax.random.PRNGKey(0)
    k_obs, k_par = jax.random.split(key)

    # Small image-like observation: [B, C, H, W] with C*H*W == features_dim.
    B, C, H, W = 32, 4, 8, 16          # 4*8*16 = 512 = features_dim
    features_dim = C * H * W
    obs = jax.random.normal(k_obs, (B, C, H, W), jnp.float32)

    params = init_params(k_par, features_dim=features_dim, hidden_dim=256)

    # B=32 -> bt=16, grid of 2 batch tiles (exercises the pipeline / megacore path).
    out = jax.block_until_ready(dvn_forward(obs, params))

    ref = reference_forward(obs, params)
    assert out.shape == (B, 1)
    # Tolerance loosened vs the f32 reference: activations and the BN-folded w1
    # are fed to the MXU in bf16 (f32 accumulation).
    assert jnp.allclose(out, ref, atol=5e-2, rtol=5e-2), "mismatch vs reference"

    print("KERNEL_OK")
</pallas_src>

<mosaic_0001>
module attributes {stable_mosaic.version = 11 : i64} {
  func.func @dvn_kernel(%arg0: i32, %arg1: memref<16x512xbf16, #tpu.memory_space<vmem>>, %arg2: memref<512x256xbf16, #tpu.memory_space<vmem>>, %arg3: memref<1x256xf32, #tpu.memory_space<vmem>>, %arg4: memref<1x256xf32, #tpu.memory_space<vmem>>, %arg5: memref<1x1xf32, #tpu.memory_space<vmem>>, %arg6: memref<16x1xf32, #tpu.memory_space<vmem>>) attributes {dimension_semantics = [#tpu.dimension_semantics<parallel>], iteration_bounds = array<i64: 2>, scalar_prefetch = 0 : i64, scratch_operands = 0 : i64, tpu.core_type = #tpu.core_type<tc>, window_params = [{transform_indices = @transform_0, window_bounds = array<i64: 16, 512>}, {pipeline_mode = #tpu.pipeline_mode<synchronous>, transform_indices = @transform_1, window_bounds = array<i64: 512, 256>}, {pipeline_mode = #tpu.pipeline_mode<synchronous>, transform_indices = @transform_2, window_bounds = array<i64: 1, 256>}, {pipeline_mode = #tpu.pipeline_mode<synchronous>, transform_indices = @transform_3, window_bounds = array<i64: 1, 256>}, {pipeline_mode = #tpu.pipeline_mode<synchronous>, transform_indices = @transform_4, window_bounds = array<i64: 1, 1>}, {transform_indices = @transform_5, window_bounds = array<i64: 16, 1>}]} {
    %c0 = arith.constant 0 : index
    %c0_0 = arith.constant 0 : index
    %0 = vector.load %arg1[%c0, %c0_0] : memref<16x512xbf16, #tpu.memory_space<vmem>>, vector<16x512xbf16>
    %c0_1 = arith.constant 0 : index
    %c0_2 = arith.constant 0 : index
    %1 = vector.load %arg2[%c0_1, %c0_2] : memref<512x256xbf16, #tpu.memory_space<vmem>>, vector<512x256xbf16>
    %cst = arith.constant dense<0.000000e+00> : vector<16x256xf32>
    %2 = tpu.matmul %0, %1, %cst {dimension_numbers = #tpu.dot_dimension_numbers<[1], [0], [0], [1], [0, 0, 1, 1], [], []>} : vector<16x512xbf16>, vector<512x256xbf16>, vector<16x256xf32> -> vector<16x256xf32>
    %c0_3 = arith.constant 0 : index
    %c0_4 = arith.constant 0 : index
    %3 = vector.load %arg3[%c0_3, %c0_4] : memref<1x256xf32, #tpu.memory_space<vmem>>, vector<1x256xf32>
    %4 = vector.broadcast %3 : vector<1x256xf32> to vector<16x256xf32>
    %5 = arith.addf %2, %4 : vector<16x256xf32>
    %cst_5 = arith.constant 0.000000e+00 : f32
    %6 = vector.broadcast %cst_5 : f32 to vector<16x256xf32>
    %7 = arith.maximumf %5, %6 : vector<16x256xf32>
    %c0_6 = arith.constant 0 : index
    %c0_7 = arith.constant 0 : index
    %8 = vector.load %arg4[%c0_6, %c0_7] : memref<1x256xf32, #tpu.memory_space<vmem>>, vector<1x256xf32>
    %9 = vector.broadcast %8 : vector<1x256xf32> to vector<16x256xf32>
    %10 = arith.mulf %7, %9 : vector<16x256xf32>
    %cst_8 = arith.constant dense<0.000000e+00> : vector<16xf32>
    %11 = vector.multi_reduction <add>, %10, %cst_8 [1] : vector<16x256xf32> to vector<16xf32>
    %12 = vector.shape_cast %11 : vector<16xf32> to vector<16x1xf32>
    %c0_9 = arith.constant 0 : index
    %c0_10 = arith.constant 0 : index
    %13 = vector.load %arg5[%c0_9, %c0_10] : memref<1x1xf32, #tpu.memory_space<vmem>>, vector<1x1xf32>
    %14 = vector.broadcast %13 : vector<1x1xf32> to vector<16x1xf32>
    %15 = arith.addf %12, %14 : vector<16x1xf32>
    %c0_11 = arith.constant 0 : index
    %c0_12 = arith.constant 0 : index
    %16 = vector.load %arg6[%c0_11, %c0_12] : memref<16x1xf32, #tpu.memory_space<vmem>>, vector<16x1xf32>
    tpu.vector_store %arg6[%c0_11, %c0_12], %15 {strides = array<i32>} : memref<16x1xf32, #tpu.memory_space<vmem>>, vector<16x1xf32>,
    return
  }
  func.func @transform_0(%arg0: i32) -> (i32, i32) {
    %c0_i32 = arith.constant 0 : i32
    %c0_i32_0 = arith.constant 0 : i32
    return %arg0, %c0_i32 : i32, i32
  }
  func.func @transform_1(%arg0: i32) -> (i32, i32) {
    %c0_i32 = arith.constant 0 : i32
    %c0_i32_0 = arith.constant 0 : i32
    %c0_i32_1 = arith.constant 0 : i32
    return %c0_i32, %c0_i32_0 : i32, i32
  }
  func.func @transform_2(%arg0: i32) -> (i32, i32) {
    %c0_i32 = arith.constant 0 : i32
    %c0_i32_0 = arith.constant 0 : i32
    %c0_i32_1 = arith.constant 0 : i32
    return %c0_i32, %c0_i32_0 : i32, i32
  }
  func.func @transform_3(%arg0: i32) -> (i32, i32) {
    %c0_i32 = arith.constant 0 : i32
    %c0_i32_0 = arith.constant 0 : i32
    %c0_i32_1 = arith.constant 0 : i32
    return %c0_i32, %c0_i32_0 : i32, i32
  }
  func.func @transform_4(%arg0: i32) -> (i32, i32) {
    %c0_i32 = arith.constant 0 : i32
    %c0_i32_0 = arith.constant 0 : i32
    %c0_i32_1 = arith.constant 0 : i32
    return %c0_i32, %c0_i32_0 : i32, i32
  }
  func.func @transform_5(%arg0: i32) -> (i32, i32) {
    %c0_i32 = arith.constant 0 : i32
    %c0_i32_0 = arith.constant 0 : i32
    return %arg0, %c0_i32 : i32, i32
  }
}

</mosaic_0001>

<llo_original>
// kernel: tpu_custom_call.1
$region0: #{tpu_custom_call.1}
  #allocation0 [shape = 'u32[]', space=smem, size = 0x4, offset = 0x4, fixed_abs, tag = 'smem constant byte address 0x4 - core index']
  #allocation1 [shape = 'u32[144,128]{1,0:T(1,128)}', space=vmem, size = 0x12000, scoped, tag = 'internal scratch']
  #allocation2 [shape = 'f32[1,1]{1,0:T(1,128)S(1)}', space=vmem, size = 0x200, scoped, tag = 'scoped memory for tpu_custom_call.1']
  %s0 = inlined_call_operand.hbm [shape: bf16[32,512], index: 0, kind: input, shape index: {}]
  %s1 = inlined_call_operand.hbm [shape: bf16[512,256], index: 1, kind: input, shape index: {}]
  %s2 = inlined_call_operand.vmem [shape: f32[1,256], index: 2, kind: input, shape index: {}]
  %s3 = inlined_call_operand.vmem [shape: f32[1,256], index: 3, kind: input, shape index: {}]
  %s4 = inlined_call_operand.<no memory space> [shape: f32[1,1], index: 4, kind: input, shape index: {}]
  %s5 = inlined_call_operand.vmem [shape: f32[32,1], index: 5, kind: output, shape index: {}]
  %s6 = sld [smem:[#allocation0]]
  $region61: #{tpu_custom_call.1} parent=0
    _
  %s8 = ssub.s32 1, %s6
  %s9 = scalar_select 0, %s8, %s6
  %v10 = vstv %s4
  %11 = vst [vmem:[#allocation2] sm:$0x1] %v10
  $region1: #{tpu_custom_call.1} parent=0
    #allocation3 [shape = 'u8[32768]{0}', space=vmem, size = 0x8000, scoped, tag = 'input window, operand 0']
    #allocation4 [shape = 's32[2]{0}', space=sflag, size = 0x8, scoped, tag = 'scoped memory for tpu_custom_call.1']
    #allocation5 [shape = 'u8[262144]{0}', space=vmem, size = 0x40000, scoped, tag = 'input window, operand 1, single buffered']
    #allocation6 [shape = 's32[1]{0}', space=sflag, size = 0x4, scoped, tag = 'scoped memory for tpu_custom_call.1']
    %12 = vsyncpa [#allocation4], 0
    %s13 = scalar_lea.sflag [#allocation4], 1
    %14 = vsyncpa %s13, 0
    %15 = vsyncpa [#allocation6], 0
    loop: start=0, step=1, limit=4
    $region2: #{tpu_custom_call.1} parent=1 // loop_pre_header
      _
    $region3: #{tpu_custom_call.1} parent=1 // loop_header
      %s17 = sphi 0, %s21
      %p18 = scmp.ge.s32.totalorder %s17, 4
      %s27 = sphi 0, %s29
      %s30 = sphi 0, %s27
      %s31 = sphi 0, %s30
      %s47 = sphi 0, %s31
      %s51 = sphi 0, %s51
      %s53 = sphi 0, %s51
      %s54 = sphi 0, %s53
      %s68 = sphi 0, %s54
      %s72 = sphi 0, %s72
      %s74 = sphi 0, %s72
      %s75 = sphi 0, %s74
      %s89 = sphi 0, %s75
      %s93 = sphi 0, %s93
      %s95 = sphi 0, %s93
      %s96 = sphi 0, %s95
      %s110 = sphi 0, %s96
      %s114 = sphi 0, %s114
      %s116 = sphi 0, %s114
      %s117 = sphi 0, %s116
      %s131 = sphi 0, %s117
      %s137 = sphi 0, %s139
      %s140 = sphi 0, %s137
      %s141 = sphi 0, %s140
      %s157 = sphi 0, %s141
    $region4: #{tpu_custom_call.1} parent=1 // loop_header_branch
      %20 = sbr.rel (%p18) target = $region8
    $region5: #{tpu_custom_call.1} parent=1 // loop_body
      %s22 = ssub.s32 %s17, 1
      %s23 = ssub.s32 %s17, 2
      %s24 = sadd.s32 %s17, 1
      %s25 = ssub.s32 %s17, %s24
      %p26 = scmp.eq.s32.totalorder %s25, 0
      %s28 = sadd.s32 %s27, 1
      %s29 = scalar_select %p26, %s27, %s28
      %p32 = pneg %p26
      %p33 = scmp.eq.s32.totalorder %s17, 1
      %p34 = por %p32, %p33
      %p35 = scmp.ne.s32.totalorder %s27, %s30
      %p36 = scmp.eq.s32.totalorder %s17, 0
      %p37 = por %p35, %p36
      %p38 = scmp.ne.s32.totalorder %s27, %s30
      %p39 = scmp.eq.s32.totalorder %s22, 1
      %p40 = por %p38, %p39
      %p41 = scmp.ne.s32.totalorder %s30, %s31
      %p42 = scmp.eq.s32.totalorder %s22, 0
      %p43 = por %p41, %p42
      %p44 = scmp.ne.s32.totalorder %s30, %s31
      %p45 = scmp.eq.s32.totalorder %s23, 1
      %p46 = por %p44, %p45
      %p48 = scmp.ne.s32.totalorder %s31, %s47
      %p49 = scmp.eq.s32.totalorder %s23, 0
      %p50 = por %p48, %p49
      %s52 = sadd.s32 %s51, 1
      %p55 = scmp.eq.s32.totalorder %s17, 1
      %p56 = scmp.ne.s32.totalorder %s51, %s53
      %p57 = scmp.eq.s32.totalorder %s17, 0
      %p58 = por %p56, %p57
      %p59 = scmp.ne.s32.totalorder %s51, %s53
      %p60 = scmp.eq.s32.totalorder %s22, 1
      %p61 = por %p59, %p60
      %p62 = scmp.ne.s32.totalorder %s53, %s54
      %p63 = scmp.eq.s32.totalorder %s22, 0
      %p64 = por %p62, %p63
      %p65 = scmp.ne.s32.totalorder %s53, %s54
      %p66 = scmp.eq.s32.totalorder %s23, 1
      %p67 = por %p65, %p66
      %p69 = scmp.ne.s32.totalorder %s54, %s68
      %p70 = scmp.eq.s32.totalorder %s23, 0
      %p71 = por %p69, %p70
      %s73 = sadd.s32 %s72, 1
      %p76 = scmp.eq.s32.totalorder %s17, 1
      %p77 = scmp.ne.s32.totalorder %s72, %s74
      %p78 = scmp.eq.s32.totalorder %s17, 0
      %p79 = por %p77, %p78
      %p80 = scmp.ne.s32.totalorder %s72, %s74
      %p81 = scmp.eq.s32.totalorder %s22, 1
      %p82 = por %p80, %p81
      %p83 = scmp.ne.s32.totalorder %s74, %s75
      %p84 = scmp.eq.s32.totalorder %s22, 0
      %p85 = por %p83, %p84
      %p86 = scmp.ne.s32.totalorder %s74, %s75
      %p87 = scmp.eq.s32.totalorder %s23, 1
      %p88 = por %p86, %p87
      %p90 = scmp.ne.s32.totalorder %s75, %s89
      %p91 = scmp.eq.s32.totalorder %s23, 0
      %p92 = por %p90, %p91
      %s94 = sadd.s32 %s93, 1
      %p97 = scmp.eq.s32.totalorder %s17, 1
      %p98 = scmp.ne.s32.totalorder %s93, %s95
      %p99 = scmp.eq.s32.totalorder %s17, 0
      %p100 = por %p98, %p99
      %p101 = scmp.ne.s32.totalorder %s93, %s95
      %p102 = scmp.eq.s32.totalorder %s22, 1
      %p103 = por %p101, %p102
      %p104 = scmp.ne.s32.totalorder %s95, %s96
      %p105 = scmp.eq.s32.totalorder %s22, 0
      %p106 = por %p104, %p105
      %p107 = scmp.ne.s32.totalorder %s95, %s96
      %p108 = scmp.eq.s32.totalorder %s23, 1
      %p109 = por %p107, %p108
      %p111 = scmp.ne.s32.totalorder %s96, %s110
      %p112 = scmp.eq.s32.totalorder %s23, 0
      %p113 = por %p111, %p112
      %s115 = sadd.s32 %s114, 1
      %p118 = scmp.eq.s32.totalorder %s17, 1
      %p119 = scmp.ne.s32.totalorder %s114, %s116
      %p120 = scmp.eq.s32.totalorder %s17, 0
      %p121 = por %p119, %p120
      %p122 = scmp.ne.s32.totalorder %s114, %s116
      %p123 = scmp.eq.s32.totalorder %s22, 1
      %p124 = por %p122, %p123
      %p125 = scmp.ne.s32.totalorder %s116, %s117
      %p126 = scmp.eq.s32.totalorder %s22, 0
      %p127 = por %p125, %p126
      %p128 = scmp.ne.s32.totalorder %s116, %s117
      %p129 = scmp.eq.s32.totalorder %s23, 1
      %p130 = por %p128, %p129
      %p132 = scmp.ne.s32.totalorder %s117, %s131
      %p133 = scmp.eq.s32.totalorder %s23, 0
      %p134 = por %p132, %p133
      %s135 = ssub.s32 %s17, %s24
      %p136 = scmp.eq.s32.totalorder %s135, 0
      %s138 = sadd.s32 %s137, 1
      %s139 = scalar_select %p136, %s137, %s138
      %p142 = pneg %p136
      %p143 = scmp.eq.s32.totalorder %s17, 1
      %p144 = por %p142, %p143
      %p145 = scmp.ne.s32.totalorder %s137, %s140
      %p146 = scmp.eq.s32.totalorder %s17, 0
      %p147 = por %p145, %p146
      %p148 = scmp.ne.s32.totalorder %s137, %s140
      %p149 = scmp.eq.s32.totalorder %s22, 1
      %p150 = por %p148, %p149
      %p151 = scmp.ne.s32.totalorder %s140, %s141
      %p152 = scmp.eq.s32.totalorder %s22, 0
      %p153 = por %p151, %p152
      %p154 = scmp.ne.s32.totalorder %s140, %s141
      %p155 = scmp.eq.s32.totalorder %s23, 1
      %p156 = por %p154, %p155
      %p158 = scmp.ne.s32.totalorder %s141, %s157
      %p159 = scmp.eq.s32.totalorder %s23, 0
      %p160 = por %p158, %p159
      %p161 = scmp.le.s32.totalorder 1, %s17
      %p162 = scmp.lt.s32.totalorder %s17, 3
      %p163 = pnand %p161, %p162
      %p164 = pneg %p163
      // Predicated region
      $region9: #{tpu_custom_call.1} parent=5 // pred_check
        _
      $region10: #{tpu_custom_call.1} parent=5 // pred_check_branch
        %166 = sbr.rel (%p163) target = $region12
      $region11: #{tpu_custom_call.1} parent=5 // pred_region
        %s167 = ssub.s32 %s17, 1
        // Predicated region
        $region13: #{tpu_custom_call.1} parent=11 // pred_check
          %p168 = pneg %p64
        $region14: #{tpu_custom_call.1} parent=11 // pred_check_branch
          %170 = sbr.rel (%p168) target = $region16
        $region15: #{tpu_custom_call.1} parent=11 // pred_region
          %s172 = ssub.s32 8192, 8192
          %173 = vsyncadd [#allocation6], %s172
          %s174 = sshll.u32 [#allocation5], 4
          %s175 = int_to_ptr.vmem [resolvable:$true] %s174
          %180 = dma.hbm_to_vmem [thread:$0]  %s1, 8192, %s175, [#allocation6], 128, 128, 8
        $region16: #{tpu_custom_call.1} parent=11 // pred_fallthru
          _
        // Predicated region
        $region17: #{tpu_custom_call.1} parent=11 // pred_check
          %p181 = pneg %p85
        $region18: #{tpu_custom_call.1} parent=11 // pred_check_branch
          %183 = sbr.rel (%p181) target = $region20
        $region19: #{tpu_custom_call.1} parent=11 // pred_region
          _
        $region20: #{tpu_custom_call.1} parent=11 // pred_fallthru
          _
        // Predicated region
        $region21: #{tpu_custom_call.1} parent=11 // pred_check
          %p184 = pneg %p106
        $region22: #{tpu_custom_call.1} parent=11 // pred_check_branch
          %186 = sbr.rel (%p184) target = $region24
        $region23: #{tpu_custom_call.1} parent=11 // pred_region
          _
        $region24: #{tpu_custom_call.1} parent=11 // pred_fallthru
          _
        // Predicated region
        $region25: #{tpu_custom_call.1} parent=11 // pred_check
          %p187 = pneg %p127
        $region26: #{tpu_custom_call.1} parent=11 // pred_check_branch
          %189 = sbr.rel (%p187) target = $region28
        $region27: #{tpu_custom_call.1} parent=11 // pred_region
          _
        $region28: #{tpu_custom_call.1} parent=11 // pred_fallthru
          _
      $region12: #{tpu_custom_call.1} parent=5 // pred_fallthru
        _
      %p190 = scmp.lt.s32.totalorder %s17, 2
      // Predicated region
      $region29: #{tpu_custom_call.1} parent=5 // pred_check
        %p191 = pneg %p190
      $region30: #{tpu_custom_call.1} parent=5 // pred_check_branch
        %193 = sbr.rel (%p191) target = $region32
      $region31: #{tpu_custom_call.1} parent=5 // pred_region
        // Predicated region
        $region33: #{tpu_custom_call.1} parent=31 // pred_check
          %p194 = pneg %p37
        $region34: #{tpu_custom_call.1} parent=31 // pred_check_branch
          %196 = sbr.rel (%p194) target = $region36
        $region35: #{tpu_custom_call.1} parent=31 // pred_region
          %s197 = sand.u32 %s27, 1
          %s198 = scalar_lea.sflag [#allocation4], %s197
          %s199 = sand.u32 %s27, 1
          %s200 = smul.addr %s199, 32
          %s201 = scalar_lea.vmem [#allocation3], %s200
          %s202 = smul.u32 2, %s17
          %s204 = ssub.s32 512, 512
          %205 = vsyncadd %s198, %s204
          %s206 = smul.addr %s202, 4
          %s207 = smul.addr %s206, 64
          %s208 = scalar_lea.hbm %s0, %s207
          %s209 = sshll.u32 %s201, 4
          %s210 = int_to_ptr.vmem [resolvable:$true] %s209
          %215 = dma.hbm_to_vmem [thread:$0]  %s208, 512, %s210, %s198, 256, 256, 16
        $region36: #{tpu_custom_call.1} parent=31 // pred_fallthru
          _
      $region32: #{tpu_custom_call.1} parent=5 // pred_fallthru
        _
      %p216 = scmp.le.s32.totalorder 1, %s17
      %p217 = scmp.lt.s32.totalorder %s17, 3
      %p218 = pnand %p216, %p217
      %p219 = pneg %p218
      // Predicated region
      $region37: #{tpu_custom_call.1} parent=5 // pred_check
        _
      $region38: #{tpu_custom_call.1} parent=5 // pred_check_branch
        %221 = sbr.rel (%p218) target = $region40
      $region39: #{tpu_custom_call.1} parent=5 // pred_region
        %s222 = ssub.s32 %s17, 1
        %s223 = sand.u32 %s30, 1
        %s224 = scalar_lea.sflag [#allocation4], %s223
        %s225 = sand.u32 %s30, 1
        %s226 = smul.addr %s225, 32
        %s227 = scalar_lea.vmem [#allocation3], %s226
        // Predicated region
        $region41: #{tpu_custom_call.1} parent=39 // pred_check
          %p228 = pneg %p43
        $region42: #{tpu_custom_call.1} parent=39 // pred_check_branch
          %230 = sbr.rel (%p228) target = $region44
        $region43: #{tpu_custom_call.1} parent=39 // pred_region
          %231 = dma.done %s224, 512
        $region44: #{tpu_custom_call.1} parent=39 // pred_fallthru
          _
        // Predicated region
        $region45: #{tpu_custom_call.1} parent=39 // pred_check
          %p232 = pneg %p64
        $region46: #{tpu_custom_call.1} parent=39 // pred_check_branch
          %234 = sbr.rel (%p232) target = $region48
        $region47: #{tpu_custom_call.1} parent=39 // pred_region
          %235 = dma.done [#allocation6], 8192
        $region48: #{tpu_custom_call.1} parent=39 // pred_fallthru
          _
        %s236 = sand.u32 %s30, 1
        %s237 = scalar_lea.sflag [#allocation4], %s236
        %s238 = sand.u32 %s30, 1
        %s239 = smul.addr %s238, 32
        %s240 = scalar_lea.vmem [#allocation3], %s239
        %p241 = pneg %p43
        %p242 = pneg %p40
        %p243 = pneg %p64
        %p244 = pneg %p61
        %p245 = pneg %p85
        %p246 = pneg %p82
        %p247 = pneg %p106
        %p248 = pneg %p103
        %p249 = pneg %p127
        %p250 = pneg %p124
        %p251 = pneg %p153
        %p252 = pneg %p150
        %s253 = smul.u32 2, %s22
        %p254 = scmp.lt.s32.totalorder %s253, 3
        %s255 = scalar_select %p254, %s253, 3
        %s256 = smul.addr %s255, 8
        %s257 = scalar_lea.vmem %s5, %s256
        %s258 = smul.u32 2, %s22
        %s259 = smul.u32 2, %s22
        %p260 = scmp.lt.s32.totalorder %s259, 3
        %s261 = scalar_select %p260, %s259, 3
        %s262 = smul.addr %s261, 8
        %s263 = scalar_lea.vmem %s5, %s262
        %s264 = smul.u32 2, %s22
        %v265 = vld [vmem:[%s227] sm:$0xff]
        %v266 = vld [vmem:[%s227 + $0x8] sm:$0xff]
        %v267 = vld [vmem:[%s227 + $0x10] sm:$0xff]
        %v268 = vld [vmem:[%s227 + $0x18] sm:$0xff]
        %v269 = vld [vmem:[#allocation5] sm:$0xff]
        %v270 = vld [vmem:[#allocation5 + $0x8] sm:$0xff]
        %v271 = vld [vmem:[#allocation5 + $0x10] sm:$0xff]
        %v272 = vld [vmem:[#allocation5 + $0x18] sm:$0xff]
        %v273 = vld [vmem:[#allocation5 + $0x20] sm:$0xff]
        %v274 = vld [vmem:[#allocation5 + $0x28] sm:$0xff]
        %v275 = vld [vmem:[#allocation5 + $0x30] sm:$0xff]
        %v276 = vld [vmem:[#allocation5 + $0x38] sm:$0xff]
        %v277 = vld [vmem:[#allocation5 + $0x40] sm:$0xff]
        %v278 = vld [vmem:[#allocation5 + $0x48] sm:$0xff]
        %v279 = vld [vmem:[#allocation5 + $0x50] sm:$0xff]
        %v280 = vld [vmem:[#allocation5 + $0x58] sm:$0xff]
        %v281 = vld [vmem:[#allocation5 + $0x60] sm:$0xff]
        %v282 = vld [vmem:[#allocation5 + $0x68] sm:$0xff]
        %v283 = vld [vmem:[#allocation5 + $0x70] sm:$0xff]
        %v284 = vld [vmem:[#allocation5 + $0x78] sm:$0xff]
        %v285 = vld [vmem:[#allocation5 + $0x80] sm:$0xff]
        %v286 = vld [vmem:[#allocation5 + $0x88] sm:$0xff]
        %v287 = vld [vmem:[#allocation5 + $0x90] sm:$0xff]
        %v288 = vld [vmem:[#allocation5 + $0x98] sm:$0xff]
        %v289 = vld [vmem:[#allocation5 + $0xa0] sm:$0xff]
        %v290 = vld [vmem:[#allocation5 + $0xa8] sm:$0xff]
        %v291 = vld [vmem:[#allocation5 + $0xb0] sm:$0xff]
        %v292 = vld [vmem:[#allocation5 + $0xb8] sm:$0xff]
        %v293 = vld [vmem:[#allocation5 + $0xc0] sm:$0xff]
        %v294 = vld [vmem:[#allocation5 + $0xc8] sm:$0xff]
        %v295 = vld [vmem:[#allocation5 + $0xd0] sm:$0xff]
        %v296 = vld [vmem:[#allocation5 + $0xd8] sm:$0xff]
        %v297 = vld [vmem:[#allocation5 + $0xe0] sm:$0xff]
        %v298 = vld [vmem:[#allocation5 + $0xe8] sm:$0xff]
        %v299 = vld [vmem:[#allocation5 + $0xf0] sm:$0xff]
        %v300 = vld [vmem:[#allocation5 + $0xf8] sm:$0xff]
        %v301 = vld [vmem:[#allocation5 + $0x100] sm:$0xff]
        %v302 = vld [vmem:[#allocation5 + $0x108] sm:$0xff]
        %v303 = vld [vmem:[#allocation5 + $0x110] sm:$0xff]
        %v304 = vld [vmem:[#allocation5 + $0x118] sm:$0xff]
        %v305 = vld [vmem:[#allocation5 + $0x120] sm:$0xff]
        %v306 = vld [vmem:[#allocation5 + $0x128] sm:$0xff]
        %v307 = vld [vmem:[#allocation5 + $0x130] sm:$0xff]
        %v308 = vld [vmem:[#allocation5 + $0x138] sm:$0xff]
        %v309 = vld [vmem:[#allocation5 + $0x140] sm:$0xff]
        %v310 = vld [vmem:[#allocation5 + $0x148] sm:$0xff]
        %v311 = vld [vmem:[#allocation5 + $0x150] sm:$0xff]
        %v312 = vld [vmem:[#allocation5 + $0x158] sm:$0xff]
        %v313 = vld [vmem:[#allocation5 + $0x160] sm:$0xff]
        %v314 = vld [vmem:[#allocation5 + $0x168] sm:$0xff]
        %v315 = vld [vmem:[#allocation5 + $0x170] sm:$0xff]
        %v316 = vld [vmem:[#allocation5 + $0x178] sm:$0xff]
        %v317 = vld [vmem:[#allocation5 + $0x180] sm:$0xff]
        %v318 = vld [vmem:[#allocation5 + $0x188] sm:$0xff]
        %v319 = vld [vmem:[#allocation5 + $0x190] sm:$0xff]
        %v320 = vld [vmem:[#allocation5 + $0x198] sm:$0xff]
        %v321 = vld [vmem:[#allocation5 + $0x1a0] sm:$0xff]
        %v322 = vld [vmem:[#allocation5 + $0x1a8] sm:$0xff]
        %v323 = vld [vmem:[#allocation5 + $0x1b0] sm:$0xff]
        %v324 = vld [vmem:[#allocation5 + $0x1b8] sm:$0xff]
        %v325 = vld [vmem:[#allocation5 + $0x1c0] sm:$0xff]
        %v326 = vld [vmem:[#allocation5 + $0x1c8] sm:$0xff]
        %v327 = vld [vmem:[#allocation5 + $0x1d0] sm:$0xff]
        %v328 = vld [vmem:[#allocation5 + $0x1d8] sm:$0xff]
        %v329 = vld [vmem:[#allocation5 + $0x1e0] sm:$0xff]
        %v330 = vld [vmem:[#allocation5 + $0x1e8] sm:$0xff]
        %v331 = vld [vmem:[#allocation5 + $0x1f0] sm:$0xff]
        %v332 = vld [vmem:[#allocation5 + $0x1f8] sm:$0xff]
        %v333 = vld [vmem:[%s2] sm:$0x3]
        %v335 = vlaneseq
        %v336 = vshrl.u32 %v335, 7
        %v337 = vsub.s32 0, %v336
        %v338 = vrot.slane %v333, %v337
        %v339 = vlaneseq
        %v340 = vshrl.u32 %v339, 7
        %v341 = vsub.s32 1, %v340
        %v342 = vrot.slane %v333, %v341
        %v349 = vunpack.c.l.b16 %v265
        %v350 = vunpack.c.h.b16 %v265
        %v351 = vunpack.c.l.b16 %v266
        %v352 = vunpack.c.h.b16 %v266
        %v353 = vunpack.c.l.b16 %v267
        %v354 = vunpack.c.h.b16 %v267
        %v355 = vunpack.c.l.b16 %v268
        %v356 = vunpack.c.h.b16 %v268
        %v357 = vpack.c.b16 %v353, %v349
        %v358 = vpack.c.b16 %v354, %v350
        %v359 = vpack.c.b16 %v355, %v351
        %v360 = vpack.c.b16 %v356, %v352
        %v429 = vunpack.c.l.b16 %v269
        %v430 = vunpack.c.h.b16 %v269
        %v431 = vunpack.c.l.b16 %v270
        %v432 = vunpack.c.h.b16 %v270
        %v433 = vunpack.c.l.b16 %v271
        %v434 = vunpack.c.h.b16 %v271
        %v435 = vunpack.c.l.b16 %v272
        %v436 = vunpack.c.h.b16 %v272
        %v437 = vunpack.c.l.b16 %v273
        %v438 = vunpack.c.h.b16 %v273
        %v439 = vunpack.c.l.b16 %v274
        %v440 = vunpack.c.h.b16 %v274
        %v441 = vunpack.c.l.b16 %v275
        %v442 = vunpack.c.h.b16 %v275
        %v443 = vunpack.c.l.b16 %v276
        %v444 = vunpack.c.h.b16 %v276
        %v445 = vunpack.c.l.b16 %v277
        %v446 = vunpack.c.h.b16 %v277
        %v447 = vunpack.c.l.b16 %v278
        %v448 = vunpack.c.h.b16 %v278
        %v449 = vunpack.c.l.b16 %v279
        %v450 = vunpack.c.h.b16 %v279
        %v451 = vunpack.c.l.b16 %v280
        %v452 = vunpack.c.h.b16 %v280
        %v453 = vunpack.c.l.b16 %v281
        %v454 = vunpack.c.h.b16 %v281
        %v455 = vunpack.c.l.b16 %v282
        %v456 = vunpack.c.h.b16 %v282
        %v457 = vunpack.c.l.b16 %v283
        %v458 = vunpack.c.h.b16 %v283
        %v459 = vunpack.c.l.b16 %v284
        %v460 = vunpack.c.h.b16 %v284
        %v461 = vunpack.c.l.b16 %v285
        %v462 = vunpack.c.h.b16 %v285
        %v463 = vunpack.c.l.b16 %v286
        %v464 = vunpack.c.h.b16 %v286
        %v465 = vunpack.c.l.b16 %v287
        %v466 = vunpack.c.h.b16 %v287
        %v467 = vunpack.c.l.b16 %v288
        %v468 = vunpack.c.h.b16 %v288
        %v469 = vunpack.c.l.b16 %v289
        %v470 = vunpack.c.h.b16 %v289
        %v471 = vunpack.c.l.b16 %v290
        %v472 = vunpack.c.h.b16 %v290
        %v473 = vunpack.c.l.b16 %v291
        %v474 = vunpack.c.h.b16 %v291
        %v475 = vunpack.c.l.b16 %v292
        %v476 = vunpack.c.h.b16 %v292
        %v477 = vunpack.c.l.b16 %v293
        %v478 = vunpack.c.h.b16 %v293
        %v479 = vunpack.c.l.b16 %v294
        %v480 = vunpack.c.h.b16 %v294
        %v481 = vunpack.c.l.b16 %v295
        %v482 = vunpack.c.h.b16 %v295
        %v483 = vunpack.c.l.b16 %v296
        %v484 = vunpack.c.h.b16 %v296
        %v485 = vunpack.c.l.b16 %v297
        %v486 = vunpack.c.h.b16 %v297
        %v487 = vunpack.c.l.b16 %v298
        %v488 = vunpack.c.h.b16 %v298
        %v489 = vunpack.c.l.b16 %v299
        %v490 = vunpack.c.h.b16 %v299
        %v491 = vunpack.c.l.b16 %v300
        %v492 = vunpack.c.h.b16 %v300
        %v493 = vunpack.c.l.b16 %v301
        %v494 = vunpack.c.h.b16 %v301
        %v495 = vunpack.c.l.b16 %v302
        %v496 = vunpack.c.h.b16 %v302
        %v497 = vunpack.c.l.b16 %v303
        %v498 = vunpack.c.h.b16 %v303
        %v499 = vunpack.c.l.b16 %v304
        %v500 = vunpack.c.h.b16 %v304
        %v501 = vunpack.c.l.b16 %v305
        %v502 = vunpack.c.h.b16 %v305
        %v503 = vunpack.c.l.b16 %v306
        %v504 = vunpack.c.h.b16 %v306
        %v505 = vunpack.c.l.b16 %v307
        %v506 = vunpack.c.h.b16 %v307
        %v507 = vunpack.c.l.b16 %v308
        %v508 = vunpack.c.h.b16 %v308
        %v509 = vunpack.c.l.b16 %v309
        %v510 = vunpack.c.h.b16 %v309
        %v511 = vunpack.c.l.b16 %v310
        %v512 = vunpack.c.h.b16 %v310
        %v513 = vunpack.c.l.b16 %v311
        %v514 = vunpack.c.h.b16 %v311
        %v515 = vunpack.c.l.b16 %v312
        %v516 = vunpack.c.h.b16 %v312
        %v517 = vunpack.c.l.b16 %v313
        %v518 = vunpack.c.h.b16 %v313
        %v519 = vunpack.c.l.b16 %v314
        %v520 = vunpack.c.h.b16 %v314
        %v521 = vunpack.c.l.b16 %v315
        %v522 = vunpack.c.h.b16 %v315
        %v523 = vunpack.c.l.b16 %v316
        %v524 = vunpack.c.h.b16 %v316
        %v525 = vunpack.c.l.b16 %v317
        %v526 = vunpack.c.h.b16 %v317
        %v527 = vunpack.c.l.b16 %v318
        %v528 = vunpack.c.h.b16 %v318
        %v529 = vunpack.c.l.b16 %v319
        %v530 = vunpack.c.h.b16 %v319
        %v531 = vunpack.c.l.b16 %v320
        %v532 = vunpack.c.h.b16 %v320
        %v533 = vunpack.c.l.b16 %v321
        %v534 = vunpack.c.h.b16 %v321
        %v535 = vunpack.c.l.b16 %v322
        %v536 = vunpack.c.h.b16 %v322
        %v537 = vunpack.c.l.b16 %v323
        %v538 = vunpack.c.h.b16 %v323
        %v539 = vunpack.c.l.b16 %v324
        %v540 = vunpack.c.h.b16 %v324
        %v541 = vunpack.c.l.b16 %v325
        %v542 = vunpack.c.h.b16 %v325
        %v543 = vunpack.c.l.b16 %v326
        %v544 = vunpack.c.h.b16 %v326
        %v545 = vunpack.c.l.b16 %v327
        %v546 = vunpack.c.h.b16 %v327
        %v547 = vunpack.c.l.b16 %v328
        %v548 = vunpack.c.h.b16 %v328
        %v549 = vunpack.c.l.b16 %v329
        %v550 = vunpack.c.h.b16 %v329
        %v551 = vunpack.c.l.b16 %v330
        %v552 = vunpack.c.h.b16 %v330
        %v553 = vunpack.c.l.b16 %v331
        %v554 = vunpack.c.h.b16 %v331
        %v555 = vunpack.c.l.b16 %v332
        %v556 = vunpack.c.h.b16 %v332
        %v557 = vpack.c.b16 %v431, %v429
        %v558 = vpack.c.b16 %v432, %v430
        %v559 = vpack.c.b16 %v435, %v433
        %v560 = vpack.c.b16 %v436, %v434
        %v561 = vpack.c.b16 %v439, %v437
        %v562 = vpack.c.b16 %v440, %v438
        %v563 = vpack.c.b16 %v443, %v441
        %v564 = vpack.c.b16 %v444, %v442
        %v565 = vpack.c.b16 %v447, %v445
        %v566 = vpack.c.b16 %v448, %v446
        %v567 = vpack.c.b16 %v451, %v449
        %v568 = vpack.c.b16 %v452, %v450
        %v569 = vpack.c.b16 %v455, %v453
        %v570 = vpack.c.b16 %v456, %v454
        %v571 = vpack.c.b16 %v459, %v457
        %v572 = vpack.c.b16 %v460, %v458
        %v573 = vpack.c.b16 %v463, %v461
        %v574 = vpack.c.b16 %v464, %v462
        %v575 = vpack.c.b16 %v467, %v465
        %v576 = vpack.c.b16 %v468, %v466
        %v577 = vpack.c.b16 %v471, %v469
        %v578 = vpack.c.b16 %v472, %v470
        %v579 = vpack.c.b16 %v475, %v473
        %v580 = vpack.c.b16 %v476, %v474
        %v581 = vpack.c.b16 %v479, %v477
        %v582 = vpack.c.b16 %v480, %v478
        %v583 = vpack.c.b16 %v483, %v481
        %v584 = vpack.c.b16 %v484, %v482
        %v585 = vpack.c.b16 %v487, %v485
        %v586 = vpack.c.b16 %v488, %v486
        %v587 = vpack.c.b16 %v491, %v489
        %v588 = vpack.c.b16 %v492, %v490
        %v589 = vpack.c.b16 %v495, %v493
        %v590 = vpack.c.b16 %v496, %v494
        %v591 = vpack.c.b16 %v499, %v497
        %v592 = vpack.c.b16 %v500, %v498
        %v593 = vpack.c.b16 %v503, %v501
        %v594 = vpack.c.b16 %v504, %v502
        %v595 = vpack.c.b16 %v507, %v505
        %v596 = vpack.c.b16 %v508, %v506
        %v597 = vpack.c.b16 %v511, %v509
        %v598 = vpack.c.b16 %v512, %v510
        %v599 = vpack.c.b16 %v515, %v513
        %v600 = vpack.c.b16 %v516, %v514
        %v601 = vpack.c.b16 %v519, %v517
        %v602 = vpack.c.b16 %v520, %v518
        %v603 = vpack.c.b16 %v523, %v521
        %v604 = vpack.c.b16 %v524, %v522
        %v605 = vpack.c.b16 %v527, %v525
        %v606 = vpack.c.b16 %v528, %v526
        %v607 = vpack.c.b16 %v531, %v529
        %v608 = vpack.c.b16 %v532, %v530
        %v609 = vpack.c.b16 %v535, %v533
        %v610 = vpack.c.b16 %v536, %v534
        %v611 = vpack.c.b16 %v539, %v537
        %v612 = vpack.c.b16 %v540, %v538
        %v613 = vpack.c.b16 %v543, %v541
        %v614 = vpack.c.b16 %v544, %v542
        %v615 = vpack.c.b16 %v547, %v545
        %v616 = vpack.c.b16 %v548, %v546
        %v617 = vpack.c.b16 %v551, %v549
        %v618 = vpack.c.b16 %v552, %v550
        %v619 = vpack.c.b16 %v555, %v553
        %v620 = vpack.c.b16 %v556, %v554
        %685 = vmatprep.subr.bf16.mxu0 %v558
        %686 = vmatpush1.bf16.msra.mxu0 %v557
        %687 = vmatprep.subr.bf16.mxu0 %v560
        %688 = vmatpush1.bf16.msra.mxu0 %v559
        %689 = vmatprep.subr.bf16.mxu0 %v562
        %690 = vmatpush1.bf16.msra.mxu0 %v561
        %691 = vmatprep.subr.bf16.mxu0 %v564
        %692 = vmatpush1.bf16.msra.mxu0 %v563
        %693 = vmatprep.subr.bf16.mxu0 %v566
        %694 = vmatpush1.bf16.msra.mxu0 %v565
        %695 = vmatprep.subr.bf16.mxu0 %v568
        %696 = vmatpush1.bf16.msra.mxu0 %v567
        %697 = vmatprep.subr.bf16.mxu0 %v570
        %698 = vmatpush1.bf16.msra.mxu0 %v569
        %699 = vmatprep.subr.bf16.mxu0 %v572
        %700 = vmatpush1.bf16.msra.mxu0 %v571
        %701 = vmatprep.subr.bf16.mxu0 %v574
        %702 = vmatpush1.bf16.msra.mxu0 %v573
        %703 = vmatprep.subr.bf16.mxu0 %v576
        %704 = vmatpush1.bf16.msra.mxu0 %v575
        %705 = vmatprep.subr.bf16.mxu0 %v578
        %706 = vmatpush1.bf16.msra.mxu0 %v577
        %707 = vmatprep.subr.bf16.mxu0 %v580
        %708 = vmatpush1.bf16.msra.mxu0 %v579
        %709 = vmatprep.subr.bf16.mxu0 %v582
        %710 = vmatpush1.bf16.msra.mxu0 %v581
        %711 = vmatprep.subr.bf16.mxu0 %v584
        %712 = vmatpush1.bf16.msra.mxu0 %v583
        %713 = vmatprep.subr.bf16.mxu0 %v586
        %714 = vmatpush1.bf16.msra.mxu0 %v585
        %715 = vmatprep.subr.bf16.mxu0 %v588
        %716 = vmatpush1.bf16.msra.mxu0 %v587
        %717 = vmatprep.mubr.bf16.mxu0 %v358
        %718 = vmatmul.mubr.bf16.gmra.mrb[0].mxu0 %v357
        %v719 = vpop.f32.mrb[0].mxu0
        %v720 = vadd.f32 %v338, %v719
        %v721 = vpop.f32.mrb[0].mxu0
        %v722 = vadd.f32 %v342, %v721
        %v723 = vpop.f32.mrb[0].mxu0
        %v724 = vadd.f32 %v338, %v723
        %v725 = vpop.f32.mrb[0].mxu0
        %v726 = vadd.f32 %v342, %v725
        %727 = vdwg.mxu0
        %728 = vmatprep.subr.bf16.mxu0 %v590
        %729 = vmatpush1.bf16.msra.mxu0 %v589
        %730 = vmatprep.subr.bf16.mxu0 %v592
        %731 = vmatpush1.bf16.msra.mxu0 %v591
        %732 = vmatprep.subr.bf16.mxu0 %v594
        %733 = vmatpush1.bf16.msra.mxu0 %v593
        %734 = vmatprep.subr.bf16.mxu0 %v596
        %735 = vmatpush1.bf16.msra.mxu0 %v595
        %736 = vmatprep.subr.bf16.mxu0 %v598
        %737 = vmatpush1.bf16.msra.mxu0 %v597
        %738 = vmatprep.subr.bf16.mxu0 %v600
        %739 = vmatpush1.bf16.msra.mxu0 %v599
        %740 = vmatprep.subr.bf16.mxu0 %v602
        %741 = vmatpush1.bf16.msra.mxu0 %v601
        %742 = vmatprep.subr.bf16.mxu0 %v604
        %743 = vmatpush1.bf16.msra.mxu0 %v603
        %744 = vmatprep.subr.bf16.mxu0 %v606
        %745 = vmatpush1.bf16.msra.mxu0 %v605
        %746 = vmatprep.subr.bf16.mxu0 %v608
        %747 = vmatpush1.bf16.msra.mxu0 %v607
        %748 = vmatprep.subr.bf16.mxu0 %v610
        %749 = vmatpush1.bf16.msra.mxu0 %v609
        %750 = vmatprep.subr.bf16.mxu0 %v612
        %751 = vmatpush1.bf16.msra.mxu0 %v611
        %752 = vmatprep.subr.bf16.mxu0 %v614
        %753 = vmatpush1.bf16.msra.mxu0 %v613
        %754 = vmatprep.subr.bf16.mxu0 %v616
        %755 = vmatpush1.bf16.msra.mxu0 %v615
        %756 = vmatprep.subr.bf16.mxu0 %v618
        %757 = vmatpush1.bf16.msra.mxu0 %v617
        %758 = vmatprep.subr.bf16.mxu0 %v620
        %759 = vmatpush1.bf16.msra.mxu0 %v619
        %760 = vmatprep.mubr.bf16.mxu0 %v360
        %761 = vmatmul.mubr.bf16.gmra.mrb[0].mxu0 %v359
        %v762 = vpop.f32.mrb[0].mxu0
        %v763 = vadd.f32 %v720, %v762
        %v764 = vpop.f32.mrb[0].mxu0
        %v765 = vadd.f32 %v722, %v764
        %v766 = vpop.f32.mrb[0].mxu0
        %v767 = vadd.f32 %v724, %v766
        %v768 = vpop.f32.mrb[0].mxu0
        %v769 = vadd.f32 %v726, %v768
        %770 = vdwg.mxu0
        %v771 = vmax.f32 %v763, 0.0
        %v772 = vmax.f32 %v765, 0.0
        %v773 = vmax.f32 %v767, 0.0
        %v774 = vmax.f32 %v769, 0.0
        %v775 = vld [vmem:[%s3] sm:$0x3]
        %v777 = vlaneseq
        %v778 = vshrl.u32 %v777, 7
        %v779 = vsub.s32 0, %v778
        %v780 = vrot.slane %v775, %v779
        %v781 = vlaneseq
        %v782 = vshrl.u32 %v781, 7
        %v783 = vsub.s32 1, %v782
        %v784 = vrot.slane %v775, %v783
        %v787 = vmul.f32 %v771, %v780
        %v788 = vmul.f32 %v772, %v784
        %v789 = vmul.f32 %v773, %v780
        %v790 = vmul.f32 %v774, %v784
        %v791 = vadd.f32 %v787, %v788
        %792 = vadd.xlane.f32.xlu0 %v791
        %v793 = vpop.xlane.xlu0 %792
        %v794 = vadd.f32 %v789, %v790
        %795 = vadd.xlane.f32.xlu0 %v794
        %v796 = vpop.xlane.xlu0 %795
        %v797 = vld [vmem:[#allocation2] sm:$0x1]
        %v799 = vlaneseq
        %v800 = vshrl.u32 %v799, 7
        %v801 = vsub.s32 0, %v800
        %v802 = vrot.slane %v797, %v801
        %v804 = vadd.f32 %v793, %v802
        %v805 = vadd.f32 %v796, %v802
        %vm806 = vcmask 7168
        %807 = vst.msk [vmem:[%s263] sm:$0xff] %vm806, %v804
        %808 = vst.msk [vmem:[%s263 + $0x8] sm:$0xff] %vm806, %v805
        %s809 = smul.u32 2, %s22
        %p810 = scmp.lt.s32.totalorder %s809, 3
        %s811 = scalar_select %p810, %s809, 3
        %s812 = smul.addr %s811, 8
        %s813 = scalar_lea.vmem %s5, %s812
        // Predicated region
        $region49: #{tpu_custom_call.1} parent=39 // pred_check
          %p814 = pneg %p150
        $region50: #{tpu_custom_call.1} parent=39 // pred_check_branch
          %816 = sbr.rel (%p814) target = $region52
        $region51: #{tpu_custom_call.1} parent=39 // pred_region
          %s817 = smul.u32 2, %s22
        $region52: #{tpu_custom_call.1} parent=39 // pred_fallthru
          _
      $region40: #{tpu_custom_call.1} parent=5 // pred_fallthru
        _
      %p818 = scmp.le.s32.totalorder 2, %s17
      // Predicated region
      $region53: #{tpu_custom_call.1} parent=5 // pred_check
        %p819 = pneg %p818
      $region54: #{tpu_custom_call.1} parent=5 // pred_check_branch
        %821 = sbr.rel (%p819) target = $region56
      $region55: #{tpu_custom_call.1} parent=5 // pred_region
        %s822 = ssub.s32 %s17, 2
        // Predicated region
        $region57: #{tpu_custom_call.1} parent=55 // pred_check
          %p823 = pneg %p156
        $region58: #{tpu_custom_call.1} parent=55 // pred_check_branch
          %825 = sbr.rel (%p823) target = $region60
        $region59: #{tpu_custom_call.1} parent=55 // pred_region
          %s826 = smul.u32 2, %s23
          %p827 = scmp.lt.s32.totalorder %s826, 3
          %s828 = scalar_select %p827, %s826, 3
          %s829 = smul.addr %s828, 8
          %s830 = scalar_lea.vmem %s5, %s829
        $region60: #{tpu_custom_call.1} parent=55 // pred_fallthru
          _
      $region56: #{tpu_custom_call.1} parent=5 // pred_fallthru
        _
    $region6: #{tpu_custom_call.1} parent=1 // loop_footer
      %s21 = sadd.s32 1, %s17
    $region7: #{tpu_custom_call.1} parent=1 // loop_footer_branch
      %16 = sbr.rel target = $region3
    $region8: #{tpu_custom_call.1} parent=1 // loop_exit
      _
    %831 = vsyncpa [#allocation4], 1
    %s832 = scalar_lea.sflag [#allocation4], 1
    %833 = vsyncpa %s832, 1
    %834 = vsyncpa [#allocation6], 1

</llo_original>
